<compile_context>
chip_gen: v6e
topology: v6e:2x2x1
jax: 0.10.0
libtpu: 0.0.40
codegen_flags: <defaults>
</compile_context>

<pallas_src>
import functools

import jax
import jax.numpy as jnp
from jax.experimental import pallas as pl
from jax.experimental.pallas import tpu as pltpu


def _eca_kernel_single(w_ref, b_ref, x_ref, o_ref, *, pad):
    # w_ref : (K,)  SMEM   conv weights pre-scaled by 1/HW (GAP folded in)
    # b_ref : (1,)  SMEM   conv bias
    # x_ref : (1, C, HWp)  whole channel slab of one batch element
    x = x_ref[...]
    s = jnp.sum(x.astype(jnp.float32), axis=-1)              # (1, C) f32 sums
    C = s.shape[1]
    if pad:
        z = jnp.zeros((1, pad), jnp.float32)
        spad = jnp.concatenate([z, s, z], axis=-1)            # conv zero padding
    else:
        spad = s
    K = w_ref.shape[0]
    y = jnp.zeros_like(s) + b_ref[0]
    for k in range(K):                                        # tiny static VPU conv
        y = y + w_ref[k] * spad[:, k:k + C]
    att = jax.nn.sigmoid(y)                                   # (1, C) f32
    o_ref[...] = (x * att[:, :, None].astype(x.dtype)).astype(o_ref.dtype)


def _eca_kernel_tiled(w_ref, b_ref, x_ref, xr_ref, o_ref, carry_ref, *, pad):
    # x_ref    : (1, Ct, HWp)  main channel tile (scaled and written out)
    # xr_ref   : (1, Hh, HWp)  channels just above the tile (right conv halo)
    # carry_ref: (1, 128) f32  sums of the previous tile's top `pad` channels
    j = pl.program_id(1)
    last_j = pl.num_programs(1) - 1

    x = x_ref[...]
    s = jnp.sum(x.astype(jnp.float32), axis=-1)               # (1, Ct)
    Ct = s.shape[1]

    right_s = jnp.sum(xr_ref[...].astype(jnp.float32), axis=-1)   # (1, Hh)
    right = right_s[:, :pad]
    right = jnp.where(j < last_j, right, jnp.zeros_like(right))   # zero pad @ top

    left = carry_ref[:, :pad]                                  # previous tile sums
    left = jnp.where(j > 0, left, jnp.zeros_like(left))        # zero pad @ bottom
    carry_ref[:, :pad] = s[:, Ct - pad:]                       # carry for next j

    spad = jnp.concatenate([left, s, right], axis=-1)          # (1, Ct + 2*pad)
    K = w_ref.shape[0]
    y = jnp.zeros_like(s) + b_ref[0]
    for k in range(K):
        y = y + w_ref[k] * spad[:, k:k + Ct]
    att = jax.nn.sigmoid(y)                                    # (1, Ct) f32
    o_ref[...] = (x * att[:, :, None].astype(x.dtype)).astype(o_ref.dtype)


def _tpu_memory_budget():
    """Generation-aware (tile_target_bytes, vmem_limit_bytes, small_vmem)."""
    vmem_cap = None
    try:
        vmem_cap = int(pltpu.get_tpu_info().vmem_capacity_bytes)
    except Exception:
        try:
            kind = jax.devices()[0].device_kind.lower()
            if "v5" in kind or "v6" in kind:
                vmem_cap = 128 * 1024 * 1024
        except Exception:
            pass
    if vmem_cap is not None and vmem_cap >= 100 * 1024 * 1024:
        # v5e / v6e: 128 MiB VMEM -> grow tiles, shrink halo & per-step overhead.
        return 10 * 1024 * 1024, 64 * 1024 * 1024, False
    # v7x (64 MiB VMEM) or unknown: conservative double-buffered budget.
    return 4 * 1024 * 1024, 40 * 1024 * 1024, True


def _pick_channel_tile(C, row_bytes, sub, target_bytes):
    """Largest multiple-of-`sub` divisor of C whose tile fits `target_bytes`."""
    if C % sub != 0:
        return C                                    # small / odd C: single slab
    divisors = [d for d in range(sub, C + 1, sub) if C % d == 0]
    fitting = [d for d in divisors if d * row_bytes <= target_bytes]
    return max(fitting) if fitting else min(divisors)


def eca_attention(x, conv_w, conv_b, *, channel_tile=None):
    """x: (B, C, H, W).  conv_w: (K,), conv_b: (1,).  Keeps x's dtype."""
    B, C, H, W = x.shape
    HW = H * W
    K = int(conv_w.shape[0])
    pad = (K - 1) // 2
    dtype = x.dtype
    isz = int(jnp.dtype(dtype).itemsize)
    Hh = {4: 8, 2: 16, 1: 32}.get(isz, 8)           # min sublane tile for dtype
    HWp = ((HW + 127) // 128) * 128                 # lane-dense spatial width

    target_bytes, vmem_limit, small_vmem = _tpu_memory_budget()
    row_bytes = HWp * isz

    if channel_tile is not None:
        Ct = int(channel_tile)
        if C % Ct != 0 or (Ct != C and Ct % Hh != 0):
            Ct = C
    else:
        Ct = _pick_channel_tile(C, row_bytes, Hh, target_bytes)
    n_ct = C // Ct

    # v7x: make sure both TensorCores get work for small-batch shapes.
    if small_vmem and channel_tile is None and B * n_ct < 2 and C % Hh == 0:
        proper = [d for d in range(Hh, C, Hh) if C % d == 0]
        if proper:
            Ct = max(proper)
            n_ct = C // Ct

    use_tiled = (n_ct > 1) and (1 <= pad <= min(Hh, Ct))
    if not use_tiled:
        Ct, n_ct = C, 1

    x_flat = x.reshape(B, C, HW)
    if HWp != HW:
        x_flat = jnp.pad(x_flat, ((0, 0), (0, 0), (0, HWp - HW)))
    w_scaled = conv_w.astype(jnp.float32) / HW       # fold GAP's 1/true-HW into w
    bias = conv_b.astype(jnp.float32)

    halo_bytes = (B * n_ct * Hh * HWp * isz) if use_tiled else 0
    cost = pl.CostEstimate(
        flops=2 * B * C * HWp,                       # spatial sum + scale
        transcendentals=B * C,                       # sigmoid
        bytes_accessed=2 * B * C * HWp * isz + halo_bytes,
    )

    if not use_tiled:
        kernel = functools.partial(_eca_kernel_single, pad=pad)
        out_flat = pl.pallas_call(
            kernel,
            out_shape=jax.ShapeDtypeStruct((B, C, HWp), dtype),
            grid=(B,),
            in_specs=[
                pl.BlockSpec(memory_space=pltpu.SMEM),      # conv weights (K,)
                pl.BlockSpec(memory_space=pltpu.SMEM),      # conv bias (1,)
                pl.BlockSpec((1, C, HWp), lambda b: (b, 0, 0)),
            ],
            out_specs=pl.BlockSpec((1, C, HWp), lambda b: (b, 0, 0)),
            compiler_params=pltpu.CompilerParams(
                dimension_semantics=("parallel",),
                vmem_limit_bytes=vmem_limit,
            ),
            cost_estimate=cost,
        )(w_scaled, bias, x_flat)
    else:
        cpb = Ct // Hh                               # halo blocks per main tile
        n_hb = C // Hh
        kernel = functools.partial(_eca_kernel_tiled, pad=pad)
        out_flat = pl.pallas_call(
            kernel,
            out_shape=jax.ShapeDtypeStruct((B, C, HWp), dtype),
            grid=(B, n_ct),
            in_specs=[
                pl.BlockSpec(memory_space=pltpu.SMEM),      # conv weights (K,)
                pl.BlockSpec(memory_space=pltpu.SMEM),      # conv bias (1,)
                pl.BlockSpec((1, Ct, HWp), lambda b, j: (b, j, 0)),
                pl.BlockSpec((1, Hh, HWp),
                             lambda b, j: (b, jnp.minimum((j + 1) * cpb,
                                                          n_hb - 1), 0)),
            ],
            out_specs=pl.BlockSpec((1, Ct, HWp), lambda b, j: (b, j, 0)),
            scratch_shapes=[pltpu.VMEM((1, 128), jnp.float32)],   # left-halo carry
            compiler_params=pltpu.CompilerParams(
                # channel axis must run sequentially for the left-halo carry;
                # batch axis stays parallel so v7x still splits across cores.
                dimension_semantics=("parallel", "arbitrary"),
                vmem_limit_bytes=vmem_limit,
            ),
            cost_estimate=cost,
        )(w_scaled, bias, x_flat, x_flat)

    if HWp != HW:
        out_flat = out_flat[:, :, :HW]
    return out_flat.reshape(B, C, H, W)


def eca_reference(x, conv_w, conv_b):
    """Pure-JAX reference matching the PyTorch forward."""
    B, C, H, W = x.shape
    K = conv_w.shape[0]
    pad = (K - 1) // 2
    m = jnp.mean(x.astype(jnp.float32), axis=(2, 3))       # (B, C)
    mp = jnp.pad(m, ((0, 0), (pad, pad)))                  # zero pad over channels
    y = conv_b[0] + sum(conv_w[k] * mp[:, k:k + C] for k in range(K))
    att = jax.nn.sigmoid(y)
    return (x * att[:, :, None, None].astype(x.dtype)).astype(x.dtype)


if __name__ == "__main__":
    key = jax.random.PRNGKey(0)
    kx, kw, kb, kx2 = jax.random.split(key, 4)

    kernel_size = 3
    # Conv1d(1, 1, kernel_size=3) parameters, deterministic synthetic init.
    conv_w = jax.random.normal(kw, (kernel_size,), dtype=jnp.float32) * 0.5
    conv_b = jax.random.normal(kb, (1,), dtype=jnp.float32) * 0.1

    # Case 1: module-sized small shape -> single-slab (no-halo) fast path.
    B, C, H, W = 2, 4, 16, 16
    x = jax.random.normal(kx, (B, C, H, W), dtype=jnp.float32)
    out = jax.block_until_ready(eca_attention(x, conv_w, conv_b))
    ref = eca_reference(x, conv_w, conv_b)
    assert out.shape == (B, C, H, W)
    assert jnp.allclose(out, ref, atol=1e-5, rtol=1e-5), "single-slab mismatch"

    # Case 2: forces the tiled path (right-halo read + left-halo VMEM carry)
    # and the HW lane padding (HW=64 -> 128).
    B2, C2, H2, W2 = 1, 32, 8, 8
    x2 = jax.random.normal(kx2, (B2, C2, H2, W2), dtype=jnp.float32)
    out2 = jax.block_until_ready(
        eca_attention(x2, conv_w, conv_b, channel_tile=8))
    ref2 = eca_reference(x2, conv_w, conv_b)
    assert out2.shape == (B2, C2, H2, W2)
    assert jnp.allclose(out2, ref2, atol=1e-5, rtol=1e-5), "tiled-path mismatch"

    print("KERNEL_OK")
</pallas_src>

<mosaic_0001>
module attributes {stable_mosaic.version = 11 : i64} {
  func.func @_eca_kernel_single(%arg0: i32, %arg1: memref<3xf32, #tpu.memory_space<smem>>, %arg2: memref<1xf32, #tpu.memory_space<smem>>, %arg3: memref<1x4x256xf32, #tpu.memory_space<vmem>>, %arg4: memref<1x4x256xf32, #tpu.memory_space<vmem>>) attributes {dimension_semantics = [#tpu.dimension_semantics<parallel>], iteration_bounds = array<i64: 2>, scalar_prefetch = 0 : i64, scratch_operands = 0 : i64, tpu.core_type = #tpu.core_type<tc>, window_params = [{transform_indices = @transform_0, window_bounds = array<i64: 3>}, {transform_indices = @transform_1, window_bounds = array<i64: 1>}, {transform_indices = @transform_2, window_bounds = array<i64: 1, 4, 256>}, {transform_indices = @transform_3, window_bounds = array<i64: 1, 4, 256>}]} {
    %c0 = arith.constant 0 : index
    %c0_0 = arith.constant 0 : index
    %c0_1 = arith.constant 0 : index
    %0 = vector.load %arg3[%c0, %c0_0, %c0_1] : memref<1x4x256xf32, #tpu.memory_space<vmem>>, vector<1x4x256xf32>
    %cst = arith.constant dense<0.000000e+00> : vector<1x4xf32>
    %1 = vector.multi_reduction <add>, %0, %cst [2] : vector<1x4x256xf32> to vector<1x4xf32>
    %cst_2 = arith.constant 0.000000e+00 : f32
    %2 = vector.broadcast %cst_2 : f32 to vector<1x1xf32>
    %3 = tpu.concatenate %2, %1, %2 in 1 : vector<1x1xf32>, vector<1x4xf32>, vector<1x1xf32> -> vector<1x6xf32>
    %cst_3 = arith.constant 0.000000e+00 : f32
    %4 = vector.broadcast %cst_3 : f32 to vector<1x4xf32>
    %c0_4 = arith.constant 0 : index
    %5 = memref.load %arg2[%c0_4] : memref<1xf32, #tpu.memory_space<smem>>
    %6 = vector.broadcast %5 : f32 to vector<1x4xf32>
    %7 = arith.addf %4, %6 : vector<1x4xf32>
    %c0_5 = arith.constant 0 : index
    %8 = memref.load %arg1[%c0_5] : memref<3xf32, #tpu.memory_space<smem>>
    %9 = vector.extract_strided_slice %3 {offsets = [0, 0], sizes = [1, 4], strides = [1, 1]} : vector<1x6xf32> to vector<1x4xf32>
    %10 = vector.broadcast %8 : f32 to vector<1x4xf32>
    %11 = arith.mulf %10, %9 : vector<1x4xf32>
    %12 = arith.addf %7, %11 : vector<1x4xf32>
    %c1 = arith.constant 1 : index
    %13 = memref.load %arg1[%c1] : memref<3xf32, #tpu.memory_space<smem>>
    %14 = vector.extract_strided_slice %3 {offsets = [0, 1], sizes = [1, 4], strides = [1, 1]} : vector<1x6xf32> to vector<1x4xf32>
    %15 = vector.broadcast %13 : f32 to vector<1x4xf32>
    %16 = arith.mulf %15, %14 : vector<1x4xf32>
    %17 = arith.addf %12, %16 : vector<1x4xf32>
    %c2 = arith.constant 2 : index
    %18 = memref.load %arg1[%c2] : memref<3xf32, #tpu.memory_space<smem>>
    %19 = vector.extract_strided_slice %3 {offsets = [0, 2], sizes = [1, 4], strides = [1, 1]} : vector<1x6xf32> to vector<1x4xf32>
    %20 = vector.broadcast %18 : f32 to vector<1x4xf32>
    %21 = arith.mulf %20, %19 : vector<1x4xf32>
    %22 = arith.addf %17, %21 : vector<1x4xf32>
    %23 = arith.negf %22 : vector<1x4xf32>
    %24 = math.exp %23 : vector<1x4xf32>
    %cst_6 = arith.constant 1.000000e+00 : f32
    %25 = vector.broadcast %cst_6 : f32 to vector<1x4xf32>
    %26 = arith.addf %25, %24 : vector<1x4xf32>
    %27 = arith.divf %25, %26 : vector<1x4xf32>
    %28 = vector.shape_cast %27 : vector<1x4xf32> to vector<1x4x1xf32>
    %29 = vector.broadcast %28 : vector<1x4x1xf32> to vector<1x4x256xf32>
    %30 = arith.mulf %0, %29 : vector<1x4x256xf32>
    %c0_7 = arith.constant 0 : index
    %c0_8 = arith.constant 0 : index
    %c0_9 = arith.constant 0 : index
    %31 = vector.load %arg4[%c0_7, %c0_8, %c0_9] : memref<1x4x256xf32, #tpu.memory_space<vmem>>, vector<1x4x256xf32>
    tpu.vector_store %arg4[%c0_7, %c0_8, %c0_9], %30 {strides = array<i32>} : memref<1x4x256xf32, #tpu.memory_space<vmem>>, vector<1x4x256xf32>,
    return
  }
  func.func @transform_0(%arg0: i32) -> i32 {
    %c0_i32 = arith.constant 0 : i32
    %c0_i32_0 = arith.constant 0 : i32
    return %c0_i32 : i32
  }
  func.func @transform_1(%arg0: i32) -> i32 {
    %c0_i32 = arith.constant 0 : i32
    %c0_i32_0 = arith.constant 0 : i32
    return %c0_i32 : i32
  }
  func.func @transform_2(%arg0: i32) -> (i32, i32, i32) {
    %c0_i32 = arith.constant 0 : i32
    %c0_i32_0 = arith.constant 0 : i32
    %c0_i32_1 = arith.constant 0 : i32
    return %arg0, %c0_i32, %c0_i32_0 : i32, i32, i32
  }
  func.func @transform_3(%arg0: i32) -> (i32, i32, i32) {
    %c0_i32 = arith.constant 0 : i32
    %c0_i32_0 = arith.constant 0 : i32
    %c0_i32_1 = arith.constant 0 : i32
    return %arg0, %c0_i32, %c0_i32_0 : i32, i32, i32
  }
}

</mosaic_0001>

<llo_original>
// kernel: tpu_custom_call.1
$region0: #{tpu_custom_call.1}
  #allocation0 [shape = 'u32[]', space=smem, size = 0x4, offset = 0x4, fixed_abs, tag = 'smem constant byte address 0x4 - core index']
  #allocation1 [shape = 'u32[144,128]{1,0:T(1,128)}', space=vmem, size = 0x12000, scoped, tag = 'internal scratch']
  #allocation2 [shape = 'f32[1]{0:T(128)S(6)}', space=smem, size = 0x200, scoped, tag = 'scoped memory for tpu_custom_call.1']
  %s0 = inlined_call_operand.vmem [shape: f32[3], index: 0, kind: input, shape index: {}]
  %s1 = inlined_call_operand.<no memory space> [shape: f32[1], index: 1, kind: input, shape index: {}]
  %s2 = inlined_call_operand.hbm [shape: f32[2,4,256], index: 2, kind: input, shape index: {}]
  %s3 = inlined_call_operand.hbm [shape: f32[2,4,256], index: 3, kind: output, shape index: {}]
  %s4 = sld [smem:[#allocation0]]
  $region53: #{tpu_custom_call.1} parent=0
    _
  %s6 = ssub.s32 1, %s4
  %s7 = scalar_select 0, %s6, %s4
  %8 = sst [smem:[#allocation2]] %s1
  $region1: #{tpu_custom_call.1} parent=0
    #allocation3 [shape = 'u8[512]{0}', space=smem, size = 0x200, scoped, tag = 'input window, operand 0, single buffered']
    #allocation4 [shape = 's32[2]{0}', space=sflag, size = 0x8, scoped, tag = 'scoped memory for tpu_custom_call.1']
    #allocation5 [shape = 's32[2]{0}', space=sflag, size = 0x8, scoped, tag = 'scoped memory for tpu_custom_call.1']
    #allocation6 [shape = 's32[2]{0}', space=sflag, size = 0x8, scoped, tag = 'scoped memory for tpu_custom_call.1']
    #allocation7 [shape = 'u8[8192]{0}', space=vmem, size = 0x2000, scoped, tag = 'input window, operand 2']
    #allocation8 [shape = 'u8[8192]{0}', space=vmem, size = 0x2000, scoped, tag = 'output window, operand 0']
    %9 = vsyncpa [#allocation6], 0
    %10 = vsyncpa [#allocation4], 0
    %s11 = scalar_lea.sflag [#allocation4], 1
    %12 = vsyncpa %s11, 0
    %13 = vsyncpa [#allocation5], 0
    %s14 = scalar_lea.sflag [#allocation5], 1
    %15 = vsyncpa %s14, 0
    loop: start=0, step=1, limit=4
    $region2: #{tpu_custom_call.1} parent=1 // loop_pre_header
      _
    $region3: #{tpu_custom_call.1} parent=1 // loop_header
      %s17 = sphi 0, %s21
      %p18 = scmp.ge.s32.totalorder %s17, 4
      %s25 = sphi 0, %s25
      %s27 = sphi 0, %s25
      %s28 = sphi 0, %s27
      %s42 = sphi 0, %s28
      %s46 = sphi 0, %s46
      %s48 = sphi 0, %s46
      %s49 = sphi 0, %s48
      %s63 = sphi 0, %s49
      %s69 = sphi 0, %s71
      %s72 = sphi 0, %s69
      %s73 = sphi 0, %s72
      %s89 = sphi 0, %s73
      %s95 = sphi 0, %s97
      %s98 = sphi 0, %s95
      %s99 = sphi 0, %s98
      %s115 = sphi 0, %s99
    $region4: #{tpu_custom_call.1} parent=1 // loop_header_branch
      %20 = sbr.rel (%p18) target = $region8
    $region5: #{tpu_custom_call.1} parent=1 // loop_body
      %s22 = ssub.s32 %s17, 1
      %s23 = ssub.s32 %s17, 2
      %s24 = sadd.s32 %s17, 1
      %s26 = sadd.s32 %s25, 1
      %p29 = scmp.eq.s32.totalorder %s17, 1
      %p30 = scmp.ne.s32.totalorder %s25, %s27
      %p31 = scmp.eq.s32.totalorder %s17, 0
      %p32 = por %p30, %p31
      %p33 = scmp.ne.s32.totalorder %s25, %s27
      %p34 = scmp.eq.s32.totalorder %s22, 1
      %p35 = por %p33, %p34
      %p36 = scmp.ne.s32.totalorder %s27, %s28
      %p37 = scmp.eq.s32.totalorder %s22, 0
      %p38 = por %p36, %p37
      %p39 = scmp.ne.s32.totalorder %s27, %s28
      %p40 = scmp.eq.s32.totalorder %s23, 1
      %p41 = por %p39, %p40
      %p43 = scmp.ne.s32.totalorder %s28, %s42
      %p44 = scmp.eq.s32.totalorder %s23, 0
      %p45 = por %p43, %p44
      %s47 = sadd.s32 %s46, 1
      %p50 = scmp.eq.s32.totalorder %s17, 1
      %p51 = scmp.ne.s32.totalorder %s46, %s48
      %p52 = scmp.eq.s32.totalorder %s17, 0
      %p53 = por %p51, %p52
      %p54 = scmp.ne.s32.totalorder %s46, %s48
      %p55 = scmp.eq.s32.totalorder %s22, 1
      %p56 = por %p54, %p55
      %p57 = scmp.ne.s32.totalorder %s48, %s49
      %p58 = scmp.eq.s32.totalorder %s22, 0
      %p59 = por %p57, %p58
      %p60 = scmp.ne.s32.totalorder %s48, %s49
      %p61 = scmp.eq.s32.totalorder %s23, 1
      %p62 = por %p60, %p61
      %p64 = scmp.ne.s32.totalorder %s49, %s63
      %p65 = scmp.eq.s32.totalorder %s23, 0
      %p66 = por %p64, %p65
      %s67 = ssub.s32 %s17, %s24
      %p68 = scmp.eq.s32.totalorder %s67, 0
      %s70 = sadd.s32 %s69, 1
      %s71 = scalar_select %p68, %s69, %s70
      %p74 = pneg %p68
      %p75 = scmp.eq.s32.totalorder %s17, 1
      %p76 = por %p74, %p75
      %p77 = scmp.ne.s32.totalorder %s69, %s72
      %p78 = scmp.eq.s32.totalorder %s17, 0
      %p79 = por %p77, %p78
      %p80 = scmp.ne.s32.totalorder %s69, %s72
      %p81 = scmp.eq.s32.totalorder %s22, 1
      %p82 = por %p80, %p81
      %p83 = scmp.ne.s32.totalorder %s72, %s73
      %p84 = scmp.eq.s32.totalorder %s22, 0
      %p85 = por %p83, %p84
      %p86 = scmp.ne.s32.totalorder %s72, %s73
      %p87 = scmp.eq.s32.totalorder %s23, 1
      %p88 = por %p86, %p87
      %p90 = scmp.ne.s32.totalorder %s73, %s89
      %p91 = scmp.eq.s32.totalorder %s23, 0
      %p92 = por %p90, %p91
      %s93 = ssub.s32 %s17, %s24
      %p94 = scmp.eq.s32.totalorder %s93, 0
      %s96 = sadd.s32 %s95, 1
      %s97 = scalar_select %p94, %s95, %s96
      %p100 = pneg %p94
      %p101 = scmp.eq.s32.totalorder %s17, 1
      %p102 = por %p100, %p101
      %p103 = scmp.ne.s32.totalorder %s95, %s98
      %p104 = scmp.eq.s32.totalorder %s17, 0
      %p105 = por %p103, %p104
      %p106 = scmp.ne.s32.totalorder %s95, %s98
      %p107 = scmp.eq.s32.totalorder %s22, 1
      %p108 = por %p106, %p107
      %p109 = scmp.ne.s32.totalorder %s98, %s99
      %p110 = scmp.eq.s32.totalorder %s22, 0
      %p111 = por %p109, %p110
      %p112 = scmp.ne.s32.totalorder %s98, %s99
      %p113 = scmp.eq.s32.totalorder %s23, 1
      %p114 = por %p112, %p113
      %p116 = scmp.ne.s32.totalorder %s99, %s115
      %p117 = scmp.eq.s32.totalorder %s23, 0
      %p118 = por %p116, %p117
      %p119 = scmp.le.s32.totalorder 1, %s17
      %p120 = scmp.lt.s32.totalorder %s17, 3
      %p121 = pnand %p119, %p120
      %p122 = pneg %p121
      // Predicated region
      $region9: #{tpu_custom_call.1} parent=5 // pred_check
        _
      $region10: #{tpu_custom_call.1} parent=5 // pred_check_branch
        %124 = sbr.rel (%p121) target = $region12
      $region11: #{tpu_custom_call.1} parent=5 // pred_region
        %s125 = ssub.s32 %s17, 1
        // Predicated region
        $region13: #{tpu_custom_call.1} parent=11 // pred_check
          %p126 = pneg %p38
        $region14: #{tpu_custom_call.1} parent=11 // pred_check_branch
          %128 = sbr.rel (%p126) target = $region16
        $region15: #{tpu_custom_call.1} parent=11 // pred_region
          %s130 = ssub.s32 16, 16
          %131 = vsyncadd [#allocation6], %s130
          %s133 = sshll.u32 %s0, 4
          %s134 = int_to_ptr.vmem [resolvable:$true] %s133
          %136 = dma.vmem_to_smem %s134, 16, [#allocation3], [#allocation6]
        $region16: #{tpu_custom_call.1} parent=11 // pred_fallthru
          _
        // Predicated region
        $region17: #{tpu_custom_call.1} parent=11 // pred_check
          %p137 = pneg %p59
        $region18: #{tpu_custom_call.1} parent=11 // pred_check_branch
          %139 = sbr.rel (%p137) target = $region20
        $region19: #{tpu_custom_call.1} parent=11 // pred_region
          _
        $region20: #{tpu_custom_call.1} parent=11 // pred_fallthru
          _
      $region12: #{tpu_custom_call.1} parent=5 // pred_fallthru
        _
      %p140 = scmp.lt.s32.totalorder %s17, 2
      // Predicated region
      $region21: #{tpu_custom_call.1} parent=5 // pred_check
        %p141 = pneg %p140
      $region22: #{tpu_custom_call.1} parent=5 // pred_check_branch
        %143 = sbr.rel (%p141) target = $region24
      $region23: #{tpu_custom_call.1} parent=5 // pred_region
        // Predicated region
        $region25: #{tpu_custom_call.1} parent=23 // pred_check
          %p144 = pneg %p79
        $region26: #{tpu_custom_call.1} parent=23 // pred_check_branch
          %146 = sbr.rel (%p144) target = $region28
        $region27: #{tpu_custom_call.1} parent=23 // pred_region
          %s147 = sand.u32 %s69, 1
          %s148 = scalar_lea.sflag [#allocation4], %s147
          %s149 = sand.u32 %s69, 1
          %s150 = smul.addr %s149, 8
          %s151 = scalar_lea.vmem [#allocation7], %s150
          %s153 = ssub.s32 128, 128
          %154 = vsyncadd %s148, %s153
          %s155 = smul.addr %s17, 2
          %s156 = smul.addr %s155, 64
          %s157 = scalar_lea.hbm %s2, %s156
          %s159 = sshll.u32 %s151, 4
          %s160 = int_to_ptr.vmem [resolvable:$true] %s159
          %162 = dma.hbm_to_vmem [thread:$0]  %s157, 128, %s160, %s148
        $region28: #{tpu_custom_call.1} parent=23 // pred_fallthru
          _
      $region24: #{tpu_custom_call.1} parent=5 // pred_fallthru
        _
      %p163 = scmp.le.s32.totalorder 1, %s17
      %p164 = scmp.lt.s32.totalorder %s17, 3
      %p165 = pnand %p163, %p164
      %p166 = pneg %p165
      // Predicated region
      $region29: #{tpu_custom_call.1} parent=5 // pred_check
        _
      $region30: #{tpu_custom_call.1} parent=5 // pred_check_branch
        %168 = sbr.rel (%p165) target = $region32
      $region31: #{tpu_custom_call.1} parent=5 // pred_region
        %s169 = ssub.s32 %s17, 1
        // Predicated region
        $region33: #{tpu_custom_call.1} parent=31 // pred_check
          %p170 = pneg %p38
        $region34: #{tpu_custom_call.1} parent=31 // pred_check_branch
          %172 = sbr.rel (%p170) target = $region36
        $region35: #{tpu_custom_call.1} parent=31 // pred_region
          %173 = dma.done [#allocation6], 16
        $region36: #{tpu_custom_call.1} parent=31 // pred_fallthru
          _
        %s174 = sand.u32 %s72, 1
        %s175 = scalar_lea.sflag [#allocation4], %s174
        %s176 = sand.u32 %s72, 1
        %s177 = smul.addr %s176, 8
        %s178 = scalar_lea.vmem [#allocation7], %s177
        // Predicated region
        $region37: #{tpu_custom_call.1} parent=31 // pred_check
          %p179 = pneg %p85
        $region38: #{tpu_custom_call.1} parent=31 // pred_check_branch
          %181 = sbr.rel (%p179) target = $region40
        $region39: #{tpu_custom_call.1} parent=31 // pred_region
          %182 = dma.done %s175, 128
        $region40: #{tpu_custom_call.1} parent=31 // pred_fallthru
          _
        %183 = sfence
        %p184 = pneg %p38
        %p185 = pneg %p35
        %p186 = pneg %p59
        %p187 = pneg %p56
        %s188 = sand.u32 %s72, 1
        %s189 = scalar_lea.sflag [#allocation4], %s188
        %s190 = sand.u32 %s72, 1
        %s191 = smul.addr %s190, 8
        %s192 = scalar_lea.vmem [#allocation7], %s191
        %p193 = pneg %p85
        %p194 = pneg %p82
        %p195 = pneg %p111
        %p196 = pneg %p108
        %s197 = sand.u32 %s98, 1
        %s198 = scalar_lea.sflag [#allocation5], %s197
        %s199 = sand.u32 %s98, 1
        %s200 = smul.addr %s199, 8
        %s201 = scalar_lea.vmem [#allocation8], %s200
        %v202 = vld [vmem:[%s178] sm:$0xff]
        %v204 = vcombine.high %v202, %v202
        %vm206 = vcmask 1043456
        %v207 = vsel %vm206, %v202, 0.0
        %v208 = vsel %vm206, %v204, 0.0
        %v209 = vadd.f32 %v207, %v208
        %210 = vadd.xlane.f32.xlu0 %v209
        %v211 = vpop.xlane.xlu0 %210
        %v213 = vlaneseq
        %v214 = vand.u32 %v213, 127
        %v215 = vadd.s32 %v214, 4294967295
        %v216 = vlaneseq
        %v217 = vshrl.u32 %v216, 7
        %v218 = vsub.s32 %v215, %v217
        %v219 = vrot.slane %v211, %v218
        %vm221 = vcmask 7168
        %v222 = vsel %vm221, 0.0, %v219
        %vm223 = vcmask 39936
        %v224 = vsel %vm223, %v222, 0.0
        %s225 = sld [smem:[#allocation2]]
        %v226 = vstv %s225
        %v227 = vadd.f32 %v226, 0.0
        %s228 = sld [smem:[#allocation3]]
        %v229 = vstv %s228
        %v230 = vmul.f32 %v229, %v224
        %v231 = vadd.f32 %v227, %v230
        %s232 = sld [smem:[#allocation3 + $0x1]]
        %v233 = vstv %s232
        %v234 = vmul.f32 %v233, %v224
        %236 = vrot.lane.b32.xlu0 %v234, 127
        %v237 = vpop.permute.xlu0 %236
        %v239 = vadd.f32 %v231, %v237
        %s240 = sld [smem:[#allocation3 + $0x2]]
        %v241 = vstv %s240
        %v242 = vmul.f32 %v241, %v224
        %244 = vrot.lane.b32.xlu0 %v242, 126
        %v245 = vpop.permute.xlu0 %244
        %v247 = vadd.f32 %v239, %v245
        %v248 = vxor.u32 %v247, 2147483648
        %v249 = vmul.f32 %v248, 1.442695
        %v250 = vpow.pop %v249
        %v251 = vadd.f32 %v250, 1.0
        %v252 = vrcp.pop %v251
        %v253 = vmul.f32 1.0, %v252
        %v254 = vlaneseq
        %v255 = vshrl.u32 %v254, 7
        %v256 = vsub.s32 0, %v255
        %v257 = vrot.slane %v253, %v256
        %259 = vbcast.lane.b32.xlu0 %v257, 256
        %v260 = vpop.permute.xlu0 %259
        %v263 = vunpack.c.l.s4 839922192
        %v264 = vunpack.c.0.s8 %v263
        %v265 = vlaneseq
        %v266 = vshrl.u32 %v265, 7
        %v267 = vsub.s32 %v264, %v266
        %v268 = vrot.slane %v260, %v267
        %v270 = vmul.f32 %v202, %v268
        %271 = vst [vmem:[%s201] sm:$0xff] %v270
        %s272 = sand.u32 %s98, 1
        %s273 = scalar_lea.sflag [#allocation5], %s272
        %s274 = sand.u32 %s98, 1
        %s275 = smul.addr %s274, 8
        %s276 = scalar_lea.vmem [#allocation8], %s275
        // Predicated region
        $region41: #{tpu_custom_call.1} parent=31 // pred_check
          %p277 = pneg %p108
        $region42: #{tpu_custom_call.1} parent=31 // pred_check_branch
          %279 = sbr.rel (%p277) target = $region44
        $region43: #{tpu_custom_call.1} parent=31 // pred_region
          %s281 = ssub.s32 128, 128
          %282 = vsyncadd %s273, %s281
          %s283 = smul.addr %s22, 2
          %s284 = smul.addr %s283, 64
          %s285 = scalar_lea.hbm %s3, %s284
          %s287 = sshll.u32 %s276, 4
          %s288 = int_to_ptr.vmem [resolvable:$true] %s287
          %290 = dma.vmem_to_hbm [thread:$0]  %s288, 128, %s285, %s273
        $region44: #{tpu_custom_call.1} parent=31 // pred_fallthru
          _
      $region32: #{tpu_custom_call.1} parent=5 // pred_fallthru
        _
      %p291 = scmp.le.s32.totalorder 2, %s17
      // Predicated region
      $region45: #{tpu_custom_call.1} parent=5 // pred_check
        %p292 = pneg %p291
      $region46: #{tpu_custom_call.1} parent=5 // pred_check_branch
        %294 = sbr.rel (%p292) target = $region48
      $region47: #{tpu_custom_call.1} parent=5 // pred_region
        %s295 = ssub.s32 %s17, 2
        // Predicated region
        $region49: #{tpu_custom_call.1} parent=47 // pred_check
          %p296 = pneg %p114
        $region50: #{tpu_custom_call.1} parent=47 // pred_check_branch
          %298 = sbr.rel (%p296) target = $region52
        $region51: #{tpu_custom_call.1} parent=47 // pred_region
          %s299 = sand.u32 %s99, 1
          %s300 = scalar_lea.sflag [#allocation5], %s299
          %s301 = sand.u32 %s99, 1
          %s302 = smul.addr %s301, 8
          %s303 = scalar_lea.vmem [#allocation8], %s302
          %304 = dma.done %s300, 128
        $region52: #{tpu_custom_call.1} parent=47 // pred_fallthru
          _
      $region48: #{tpu_custom_call.1} parent=5 // pred_fallthru
        _
    $region6: #{tpu_custom_call.1} parent=1 // loop_footer
      %s21 = sadd.s32 1, %s17
    $region7: #{tpu_custom_call.1} parent=1 // loop_footer_branch
      %16 = sbr.rel target = $region3
    $region8: #{tpu_custom_call.1} parent=1 // loop_exit
      _
    %305 = vsyncpa [#allocation4], 1
    %s306 = scalar_lea.sflag [#allocation4], 1
    %307 = vsyncpa %s306, 1
    %308 = vsyncpa [#allocation5], 1
    %s309 = scalar_lea.sflag [#allocation5], 1
    %310 = vsyncpa %s309, 1
    %311 = vsyncpa [#allocation6], 1
    %s312 = scalar_lea.sflag [#allocation6], 1
    %313 = vsyncpa %s312, 1

</llo_original>
